<compile_context>
chip_gen: v5e
topology: v5e:2x2
jax: 0.10.0
libtpu: 0.0.40
codegen_flags: <defaults>
</compile_context>

<pallas_src>
import functools

import jax
import jax.numpy as jnp
from jax.experimental import pallas as pl
from jax.experimental.pallas import tpu as pltpu


def _round_up(v: int, m: int) -> int:
    return -(-v // m) * m


def _cdiv(a: int, b: int) -> int:
    return -(-a // b)


def _pos_update_kernel(x_ref, w_ref, b_ref, o_ref, *, scale: float):
    # x_ref: (tm4, f*dim) VMEM tile (lane-dense folded rows)
    # w_ref: (f*dim, f)   VMEM resident block-diagonal weight
    # b_ref: (1, 1)       SMEM bias scalar
    # o_ref: (tm4, f)     VMEM output tile
    z = jnp.dot(x_ref[...], w_ref[...], preferred_element_type=jnp.float32)
    z = z + b_ref[0, 0]
    o_ref[...] = (jnp.tanh(z) * scale).astype(o_ref.dtype)


def pos_update_block_simple(
    x, weight, bias, *, scale,
    vmem_budget_bytes: int = 24 * 1024 * 1024,   # tiles (double-buffered) budget
    target_block_bytes: int = 4 * 1024 * 1024,   # aim ~4 MiB of x per grid step
    min_block_bytes: int = 2 * 1024 * 1024,      # never split below ~2 MiB/step
):
    """x: (..., dim); weight: (1, dim); bias: (1,). Returns (..., 1)."""
    orig_shape = x.shape
    dim = orig_shape[-1]
    x2d = x.reshape(-1, dim)                     # free reshape, no copy
    rows = x2d.shape[0]
    dtype = x2d.dtype
    itemsize = dtype.itemsize

    # ---- fold f rows into the lane axis (lane-dense x tiles) --------------
    f = max(1, 128 // dim)
    rows_pad = _round_up(rows, f)
    if rows_pad != rows:
        # TODO(synk): rare path -- zero-pad costs one extra HBM copy of x.
        x2d = jnp.pad(x2d, ((0, rows_pad - rows), (0, 0)))
    rows4 = rows_pad // f
    fd = f * dim
    x_folded = x2d.reshape(rows4, fd)            # free, contiguous reshape

    # Block-diagonal weight: w_bd[k*dim + d, j] = w[d] if k == j else 0,
    # so (x_folded @ w_bd)[r, j] = <x2d[r*f + j, :], w>.
    w_vec = weight.reshape(dim).astype(dtype)
    eye = jnp.eye(f, dtype=dtype)
    w_bd = (eye[:, None, :] * w_vec[None, :, None]).reshape(fd, f)
    b2d = bias.reshape(1, 1).astype(jnp.float32)

    # ---- tile / grid selection (VMEM-budgeted, multi-MiB blocks) ----------
    lane_w = _round_up(fd, 128)
    x_row_vmem = lane_w * itemsize               # folded x row bytes in VMEM
    out_row_vmem = 128 * itemsize                # (tm4, f) lane-padded to 128
    vmem_per_row = 2 * (x_row_vmem + out_row_vmem)  # double-buffered in + out
    tm4_cap = max(8, (vmem_budget_bytes // vmem_per_row) // 8 * 8)

    total_bytes = rows4 * x_row_vmem
    if rows4 <= tm4_cap and total_bytes <= 2 * min_block_bytes:
        num_blocks, tm4 = 1, rows4               # small input: one block, no split
    else:
        nb_vmem = _cdiv(rows4, tm4_cap)                         # forced by VMEM
        nb_tgt = _cdiv(total_bytes, max(1, target_block_bytes)) # ~4 MiB blocks
        nb_max = max(1, total_bytes // max(1, min_block_bytes)) # keep >=2 MiB/step
        num_blocks = max(nb_vmem, min(nb_tgt, nb_max), 1)
        tm4 = min(_round_up(_cdiv(rows4, num_blocks), 8), tm4_cap)
        num_blocks = _cdiv(rows4, tm4)
        if num_blocks == 1:
            tm4 = rows4

    kernel = functools.partial(_pos_update_kernel, scale=float(scale))

    cost = pl.CostEstimate(
        flops=2 * rows_pad * dim,
        transcendentals=rows_pad,
        bytes_accessed=rows_pad * dim * itemsize + rows_pad * itemsize
        + fd * f * itemsize,
    )

    out = pl.pallas_call(
        kernel,
        out_shape=jax.ShapeDtypeStruct((rows4, f), dtype),
        grid_spec=pltpu.PrefetchScalarGridSpec(
            num_scalar_prefetch=0,
            grid=(num_blocks,),
            in_specs=[
                pl.BlockSpec((tm4, fd), lambda i: (i, 0)),   # x tile (tail clipped)
                pl.BlockSpec((fd, f), lambda i: (0, 0)),     # weight (resident)
                pl.BlockSpec(memory_space=pltpu.SMEM),       # bias scalar
            ],
            out_specs=pl.BlockSpec((tm4, f), lambda i: (i, 0)),
        ),
        compiler_params=pltpu.CompilerParams(
            dimension_semantics=("parallel",),
            vmem_limit_bytes=32 * 1024 * 1024,
        ),
        cost_estimate=cost,
    )(x_folded, w_bd, b2d)

    out = out.reshape(-1)[:rows]                 # drop fold-padding rows
    return out.reshape(*orig_shape[:-1], 1)


if __name__ == "__main__":
    key = jax.random.PRNGKey(0)
    k_x, k_w, k_b, k_x2, k_x3 = jax.random.split(key, 5)

    dim = 32
    start, end = -5.0, 5.0
    assert start == -end
    scale = end

    # Deterministic Linear(dim, 1) init, uniform like torch default.
    bound = 1.0 / (dim ** 0.5)
    weight = jax.random.uniform(k_w, (1, dim), jnp.float32, -bound, bound)
    bias = jax.random.uniform(k_b, (1,), jnp.float32, -bound, bound)

    def reference(x):
        z = jnp.einsum("...d,od->...o", x, weight) + bias
        return jnp.tanh(z) * scale

    # 1) Small shape implied by the module (batch=2, seq=8, dim=32): single block.
    x_small = jax.random.normal(k_x, (2, 8, dim), jnp.float32)
    y = jax.block_until_ready(
        pos_update_block_simple(x_small, weight, bias, scale=scale))
    assert y.shape == (2, 8, 1), y.shape
    assert jnp.allclose(y, reference(x_small), atol=1e-5, rtol=1e-5), (
        float(jnp.max(jnp.abs(y - reference(x_small)))))

    # 2) Rows not a multiple of the fold factor (exercises the pad path).
    x_odd = jax.random.normal(k_x2, (5, 7, dim), jnp.float32)
    y = jax.block_until_ready(
        pos_update_block_simple(x_odd, weight, bias, scale=scale))
    assert y.shape == (5, 7, 1), y.shape
    assert jnp.allclose(y, reference(x_odd), atol=1e-5, rtol=1e-5), (
        float(jnp.max(jnp.abs(y - reference(x_odd)))))

    # 3) Force the multi-block path + clipped tail block on a still-small shape
    #    by shrinking the block-size targets (rows4=75, tm4=8 -> 10 blocks).
    x_multi = jax.random.normal(k_x3, (3, 100, dim), jnp.float32)
    y = jax.block_until_ready(
        pos_update_block_simple(
            x_multi, weight, bias, scale=scale,
            target_block_bytes=4096, min_block_bytes=512))
    assert y.shape == (3, 100, 1), y.shape
    assert jnp.allclose(y, reference(x_multi), atol=1e-5, rtol=1e-5), (
        float(jnp.max(jnp.abs(y - reference(x_multi)))))

    print("KERNEL_OK")
</pallas_src>

<mosaic_0001>
module attributes {stable_mosaic.version = 11 : i64} {
  func.func @_pos_update_kernel(%arg0: i32, %arg1: memref<4x128xf32, #tpu.memory_space<vmem>>, %arg2: memref<128x4xf32, #tpu.memory_space<vmem>>, %arg3: memref<1x1xf32, #tpu.memory_space<smem>>, %arg4: memref<4x4xf32, #tpu.memory_space<vmem>>) attributes {dimension_semantics = [#tpu.dimension_semantics<parallel>], iteration_bounds = array<i64: 1>, scalar_prefetch = 0 : i64, scratch_operands = 0 : i64, tpu.core_type = #tpu.core_type<tc>, window_params = [{transform_indices = @transform_0, window_bounds = array<i64: 4, 128>}, {pipeline_mode = #tpu.pipeline_mode<synchronous>, transform_indices = @transform_1, window_bounds = array<i64: 128, 4>}, {transform_indices = @transform_2, window_bounds = array<i64: 1, 1>}, {transform_indices = @transform_3, window_bounds = array<i64: 4, 4>}]} {
    %c0 = arith.constant 0 : index
    %c0_0 = arith.constant 0 : index
    %0 = vector.load %arg1[%c0, %c0_0] : memref<4x128xf32, #tpu.memory_space<vmem>>, vector<4x128xf32>
    %c0_1 = arith.constant 0 : index
    %c0_2 = arith.constant 0 : index
    %1 = vector.load %arg2[%c0_1, %c0_2] : memref<128x4xf32, #tpu.memory_space<vmem>>, vector<128x4xf32>
    %cst = arith.constant dense<0.000000e+00> : vector<4x4xf32>
    %2 = tpu.matmul %0, %1, %cst {dimension_numbers = #tpu.dot_dimension_numbers<[1], [0], [0], [1], [0, 0, 1, 1], [], []>} : vector<4x128xf32>, vector<128x4xf32>, vector<4x4xf32> -> vector<4x4xf32>
    %c0_3 = arith.constant 0 : index
    %c0_4 = arith.constant 0 : index
    %3 = memref.load %arg3[%c0_3, %c0_4] : memref<1x1xf32, #tpu.memory_space<smem>>
    %4 = vector.broadcast %3 : f32 to vector<4x4xf32>
    %5 = arith.addf %2, %4 : vector<4x4xf32>
    %6 = math.tanh %5 : vector<4x4xf32>
    %cst_5 = arith.constant 5.000000e+00 : f32
    %7 = vector.broadcast %cst_5 : f32 to vector<4x4xf32>
    %8 = arith.mulf %6, %7 : vector<4x4xf32>
    %c0_6 = arith.constant 0 : index
    %c0_7 = arith.constant 0 : index
    %9 = vector.load %arg4[%c0_6, %c0_7] : memref<4x4xf32, #tpu.memory_space<vmem>>, vector<4x4xf32>
    tpu.vector_store %arg4[%c0_6, %c0_7], %8 {strides = array<i32>} : memref<4x4xf32, #tpu.memory_space<vmem>>, vector<4x4xf32>,
    return
  }
  func.func @transform_0(%arg0: i32) -> (i32, i32) {
    %c0_i32 = arith.constant 0 : i32
    %c0_i32_0 = arith.constant 0 : i32
    return %arg0, %c0_i32 : i32, i32
  }
  func.func @transform_1(%arg0: i32) -> (i32, i32) {
    %c0_i32 = arith.constant 0 : i32
    %c0_i32_0 = arith.constant 0 : i32
    %c0_i32_1 = arith.constant 0 : i32
    return %c0_i32, %c0_i32_0 : i32, i32
  }
  func.func @transform_2(%arg0: i32) -> (i32, i32) {
    %c0_i32 = arith.constant 0 : i32
    %c0_i32_0 = arith.constant 0 : i32
    %c0_i32_1 = arith.constant 0 : i32
    return %c0_i32, %c0_i32_0 : i32, i32
  }
  func.func @transform_3(%arg0: i32) -> (i32, i32) {
    %c0_i32 = arith.constant 0 : i32
    %c0_i32_0 = arith.constant 0 : i32
    return %arg0, %c0_i32 : i32, i32
  }
}

</mosaic_0001>

<llo_original>
// kernel: tpu_custom_call.1
$region0: #{tpu_custom_call.1}
  #allocation0 [shape = 'u32[]', space=smem, size = 0x4, offset = 0x4, fixed_abs, tag = 'smem constant byte address 0x4 - core index']
  #allocation1 [shape = 'u32[72,128]{1,0:T(1,128)}', space=vmem, size = 0x9000, scoped, tag = 'internal scratch']
  #allocation2 [shape = 'f32[1,1]{1,0:T(1,128)S(6)}', space=smem, size = 0x200, scoped, tag = 'scoped memory for tpu_custom_call.1']
  %s0 = inlined_call_operand.vmem [shape: f32[4,128], index: 0, kind: input, shape index: {}]
  %s1 = inlined_call_operand.vmem [shape: f32[128,4], index: 1, kind: input, shape index: {}]
  %s2 = inlined_call_operand.<no memory space> [shape: f32[1,1], index: 2, kind: input, shape index: {}]
  %s3 = inlined_call_operand.hbm [shape: f32[4,4], index: 3, kind: output, shape index: {}]
  %s4 = sld [smem:[#allocation0]]
  $region22: #{tpu_custom_call.1} parent=0
    _
  %s6 = ssub.s32 1, %s4
  %s7 = scalar_select 0, %s6, %s4
  %8 = sst [smem:[#allocation2]] %s2
  $region1: #{tpu_custom_call.1} parent=0
    #allocation3 [shape = 'u8[2048]{0}', space=vmem, size = 0x800, scoped, tag = 'output window, operand 0, single buffered']
    #allocation4 [shape = 's32[1]{0}', space=sflag, size = 0x4, scoped, tag = 'scoped memory for tpu_custom_call.1']
    %9 = vsyncpa [#allocation4], 0
    // Predicated region
    $region2: #{tpu_custom_call.1} parent=1 // pred_check
      _
    $region3: #{tpu_custom_call.1} parent=1 // pred_check_branch
      %11 = sbr.rel (0) target = $region5
    $region4: #{tpu_custom_call.1} parent=1 // pred_region
      _
    $region5: #{tpu_custom_call.1} parent=1 // pred_fallthru
      _
    // Predicated region
    $region6: #{tpu_custom_call.1} parent=1 // pred_check
      _
    $region7: #{tpu_custom_call.1} parent=1 // pred_check_branch
      %13 = sbr.rel (0) target = $region9
    $region8: #{tpu_custom_call.1} parent=1 // pred_region
      _
    $region9: #{tpu_custom_call.1} parent=1 // pred_fallthru
      _
    // Predicated region
    $region10: #{tpu_custom_call.1} parent=1 // pred_check
      _
    $region11: #{tpu_custom_call.1} parent=1 // pred_check_branch
      %15 = sbr.rel (0) target = $region13
    $region12: #{tpu_custom_call.1} parent=1 // pred_region
      _
    $region13: #{tpu_custom_call.1} parent=1 // pred_fallthru
      _
    %v16 = vld [vmem:[%s0] sm:$0xf]
    %v17 = vld [vmem:[%s1] sm:$0xff]
    %v18 = vld [vmem:[%s1 + $0x8] sm:$0xff]
    %v19 = vld [vmem:[%s1 + $0x10] sm:$0xff]
    %v20 = vld [vmem:[%s1 + $0x18] sm:$0xff]
    %v21 = vld [vmem:[%s1 + $0x20] sm:$0xff]
    %v22 = vld [vmem:[%s1 + $0x28] sm:$0xff]
    %v23 = vld [vmem:[%s1 + $0x30] sm:$0xff]
    %v24 = vld [vmem:[%s1 + $0x38] sm:$0xff]
    %v25 = vld [vmem:[%s1 + $0x40] sm:$0xff]
    %v26 = vld [vmem:[%s1 + $0x48] sm:$0xff]
    %v27 = vld [vmem:[%s1 + $0x50] sm:$0xff]
    %v28 = vld [vmem:[%s1 + $0x58] sm:$0xff]
    %v29 = vld [vmem:[%s1 + $0x60] sm:$0xff]
    %v30 = vld [vmem:[%s1 + $0x68] sm:$0xff]
    %v31 = vld [vmem:[%s1 + $0x70] sm:$0xff]
    %v32 = vld [vmem:[%s1 + $0x78] sm:$0xff]
    %s33 = sld [smem:[#allocation2]]
    %v34 = vstv %s33
    %35 = vmatpush.msra.mxu0 %v32
    %36 = vmatpush.msra.mxu0 %v31
    %37 = vmatpush.msra.mxu0 %v30
    %38 = vmatpush.msra.mxu0 %v29
    %39 = vmatpush.msra.mxu0 %v28
    %40 = vmatpush.msra.mxu0 %v27
    %41 = vmatpush.msra.mxu0 %v26
    %42 = vmatpush.msra.mxu0 %v25
    %43 = vmatpush.msra.mxu0 %v24
    %44 = vmatpush.msra.mxu0 %v23
    %45 = vmatpush.msra.mxu0 %v22
    %46 = vmatpush.msra.mxu0 %v21
    %47 = vmatpush.msra.mxu0 %v20
    %48 = vmatpush.msra.mxu0 %v19
    %49 = vmatpush.msra.mxu0 %v18
    %50 = vmatpush.msra.mxu0 %v17
    %51 = vmatmul.f32.gmra.mxu0 %v16
    %v52 = vpop.f32.mrf.mxu0
    %v53 = vadd.f32 %v34, %v52
    %54 = vdwg.mxu0
    %v55 = vtanh.pop %v53
    %v56 = vmul.f32 %v55, 5.0
    %vm57 = vcmask 27648
    %58 = vst.msk [vmem:[#allocation3] sm:$0xf] %vm57, %v56
    // Predicated region
    $region14: #{tpu_custom_call.1} parent=1 // pred_check
      _
    $region15: #{tpu_custom_call.1} parent=1 // pred_check_branch
      %60 = sbr.rel (0) target = $region17
    $region16: #{tpu_custom_call.1} parent=1 // pred_region
      %62 = vsyncadd [#allocation4], 0
      %s64 = sshll.u32 [#allocation3], 4
      %s65 = int_to_ptr.vmem [resolvable:$true] %s64
      %s66 = sshll.u32 %s3, 4
      %s67 = int_to_ptr.hbm [resolvable:$true] %s66
      %69 = dma.vmem_to_hbm [thread:$0]  %s65, 64, %s67, [#allocation4]
    $region17: #{tpu_custom_call.1} parent=1 // pred_fallthru
      _
    // Predicated region
    $region18: #{tpu_custom_call.1} parent=1 // pred_check
      _
    $region19: #{tpu_custom_call.1} parent=1 // pred_check_branch
      %71 = sbr.rel (0) target = $region21
    $region20: #{tpu_custom_call.1} parent=1 // pred_region
      %73 = dma.done [#allocation4], 64
    $region21: #{tpu_custom_call.1} parent=1 // pred_fallthru
      _
    %74 = vsyncpa [#allocation4], 1

</llo_original>
